<compile_context>
chip_gen: v5e
topology: v5e:2x2
jax: 0.10.0
libtpu: 0.0.40
codegen_flags: <defaults>
</compile_context>

<pallas_src>
import jax
import jax.numpy as jnp
from jax.experimental import pallas as pl
from jax.experimental.pallas import tpu as pltpu


def _round_up(x, m):
    return ((x + m - 1) // m) * m


def _pick_tb(B, tb_target):
    """Batch tile: full array when tiny, otherwise a multiple of 16 (bf16 sublane
    packing) capped so the grid has >=2 steps (v7x megacore)."""
    if B <= 16:
        return B                       # block == full array dims -> always legal
    tb = min(tb_target, _round_up(B, 16))
    half = max(16, _round_up(pl.cdiv(B, 2), 16))
    return min(tb, half)


def linear32_kernel(x_ref, w1_ref, b1_ref, w2_ref, b2_ref, w3_ref, b3_ref, o_ref):
    # x: (TB, F) f32; weights bf16 with BN pre-folded; biases f32 (1, dim).
    x = x_ref[...].astype(jnp.bfloat16)

    # ---- linear1 (+ folded BN1) + ReLU ----
    h1 = jnp.dot(x, w1_ref[...], preferred_element_type=jnp.float32) + b1_ref[...]
    h1 = jnp.maximum(h1, 0.0).astype(jnp.bfloat16)
    # dropout1 -> identity in eval mode

    # ---- linear2 (+ folded BN2) + ReLU ----
    h2 = jnp.dot(h1, w2_ref[...], preferred_element_type=jnp.float32) + b2_ref[...]
    h2 = jnp.maximum(h2, 0.0).astype(jnp.bfloat16)
    # forward reuses dropout1 -> identity in eval mode

    # ---- fully_connected ----
    out = jnp.dot(h2, w3_ref[...], preferred_element_type=jnp.float32) + b3_ref[...]
    o_ref[...] = out.astype(o_ref.dtype)


def prepare_params(params):
    """One-time parameter prep (call once, cache the result): fold eval-mode
    BatchNorm running stats into the linear weights/biases and cast weights to
    bf16.  The per-forward wrapper then does no weight math at all."""
    w1 = (params["w1"] * params["s1"]).astype(jnp.bfloat16)
    b1 = (params["b1"] * params["s1"] + params["sh1"]).astype(jnp.float32)
    w2 = (params["w2"] * params["s2"]).astype(jnp.bfloat16)
    b2 = (params["b2"] * params["s2"] + params["sh2"]).astype(jnp.float32)
    w3 = params["w3"].astype(jnp.bfloat16)
    b3 = params["b3"].astype(jnp.float32)
    return dict(w1=w1, b1=b1, w2=w2, b2=b2, w3=w3, b3=b3)


def linear32_forward(x, prep, *, tb_target=1024, out_dtype=jnp.float32):
    """x: (B, num_features) float32. prep: output of prepare_params()."""
    B, F = x.shape
    H = prep["w1"].shape[1]
    O = prep["w3"].shape[1]

    TB = _pick_tb(B, tb_target)
    grid = (pl.cdiv(B, TB),)

    def resident(a):
        # Whole-array block, same block index every grid step -> stays VMEM-resident
        # (Pallas skips the re-DMA when the block index does not change).
        return pl.BlockSpec(a.shape, lambda i: (0,) * a.ndim)

    out_itemsize = jnp.dtype(out_dtype).itemsize
    param_bytes = sum(v.size * v.dtype.itemsize for v in prep.values())

    # Cost estimate from true (unpadded) traffic.
    flops = 2 * B * (F * H + H * H + H * O)
    bytes_accessed = x.size * x.dtype.itemsize + param_bytes + B * O * out_itemsize

    # VMEM budget: double-buffered x/out tiles, resident (double-buffered) params,
    # and f32 intermediates.  Only override the scoped limit when needed; cap at
    # v7x physical VMEM (64 MiB).
    vmem_est = (
        2 * TB * F * x.dtype.itemsize
        + 2 * TB * O * out_itemsize
        + 2 * param_bytes
        + TB * (2 * H + O) * 4
    )
    vmem_limit = None
    if vmem_est * 2 > (16 << 20):          # 16 MiB = smallest default scoped limit (v5e)
        vmem_limit = int(min(64 << 20, vmem_est * 2))

    out = pl.pallas_call(
        linear32_kernel,
        out_shape=jax.ShapeDtypeStruct((B, O), out_dtype),
        grid=grid,
        in_specs=[
            pl.BlockSpec((TB, F), lambda i: (i, 0)),     # batch-tiled x (unpadded F)
            resident(prep["w1"]), resident(prep["b1"]),
            resident(prep["w2"]), resident(prep["b2"]),
            resident(prep["w3"]), resident(prep["b3"]),
        ],
        out_specs=pl.BlockSpec((TB, O), lambda i: (i, 0)),
        compiler_params=pltpu.CompilerParams(
            dimension_semantics=("parallel",),
            vmem_limit_bytes=vmem_limit,
        ),
        cost_estimate=pl.CostEstimate(
            flops=flops, transcendentals=0, bytes_accessed=bytes_accessed),
    )(x, prep["w1"], prep["b1"], prep["w2"], prep["b2"], prep["w3"], prep["b3"])

    return out


def init_params(key, num_features, filter_size, num_out, eps=1e-5):
    """Mimics nn.Linear default init (uniform +/- 1/sqrt(fan_in)) and
    nn.BatchNorm1d defaults (gamma=1, beta=0, running_mean=0, running_var=1)."""
    keys = jax.random.split(key, 6)

    def linear_init(kw, kb, fan_in, fan_out):
        bound = 1.0 / jnp.sqrt(fan_in)
        # PyTorch weight is (out, in); store transposed (in, out) for x @ W.
        w = jax.random.uniform(kw, (fan_in, fan_out), jnp.float32, -bound, bound)
        b = jax.random.uniform(kb, (1, fan_out), jnp.float32, -bound, bound)
        return w, b

    w1, b1 = linear_init(keys[0], keys[1], num_features, filter_size)
    w2, b2 = linear_init(keys[2], keys[3], filter_size, filter_size)
    w3, b3 = linear_init(keys[4], keys[5], filter_size, num_out)

    def bn_fold(gamma, beta, mean, var):
        scale = gamma / jnp.sqrt(var + eps)
        shift = beta - mean * scale
        return scale.reshape(1, -1), shift.reshape(1, -1)

    ones = jnp.ones((filter_size,), jnp.float32)
    zeros = jnp.zeros((filter_size,), jnp.float32)
    s1, sh1 = bn_fold(ones, zeros, zeros, ones)
    s2, sh2 = bn_fold(ones, zeros, zeros, ones)

    return dict(
        w1=w1, b1=b1, s1=s1, sh1=sh1,
        w2=w2, b2=b2, s2=s2, sh2=sh2,
        w3=w3, b3=b3,
    )


def _reference_forward(x, params):
    """Pure-JAX reference matching the kernel's numerics (BN folded, bf16 operands,
    f32 accumulation)."""
    def q(a):
        return a.astype(jnp.bfloat16).astype(jnp.float32)

    w1 = params["w1"] * params["s1"]
    b1 = params["b1"] * params["s1"] + params["sh1"]
    w2 = params["w2"] * params["s2"]
    b2 = params["b2"] * params["s2"] + params["sh2"]

    h1 = jnp.maximum(q(x) @ q(w1) + b1, 0.0)
    h2 = jnp.maximum(q(h1) @ q(w2) + b2, 0.0)
    return q(h2) @ q(params["w3"]) + params["b3"]


if __name__ == "__main__":
    key = jax.random.PRNGKey(0)
    k_x, k_p = jax.random.split(key)

    B = 8
    num_features = 32
    filter_size = 64   # filter_sizes[0]
    num_out = 16

    x = jax.random.normal(k_x, (B, num_features), jnp.float32)
    params = init_params(k_p, num_features, filter_size, num_out)

    # One-time parameter prep (hoisted out of the forward path per perf review).
    prep = prepare_params(params)

    out = linear32_forward(x, prep)
    out = jax.block_until_ready(out)

    ref = _reference_forward(x, params)
    assert out.shape == (B, num_out)
    assert jnp.allclose(out, ref, atol=1e-3, rtol=1e-3), (
        float(jnp.max(jnp.abs(out - ref))))

    print("KERNEL_OK")
</pallas_src>

<mosaic_0001>
module attributes {stable_mosaic.version = 11 : i64} {
  func.func @linear32_kernel(%arg0: i32, %arg1: memref<8x32xf32, #tpu.memory_space<vmem>>, %arg2: memref<32x64xbf16, #tpu.memory_space<vmem>>, %arg3: memref<1x64xf32, #tpu.memory_space<vmem>>, %arg4: memref<64x64xbf16, #tpu.memory_space<vmem>>, %arg5: memref<1x64xf32, #tpu.memory_space<vmem>>, %arg6: memref<64x16xbf16, #tpu.memory_space<vmem>>, %arg7: memref<1x16xf32, #tpu.memory_space<vmem>>, %arg8: memref<8x16xf32, #tpu.memory_space<vmem>>) attributes {dimension_semantics = [#tpu.dimension_semantics<parallel>], iteration_bounds = array<i64: 1>, scalar_prefetch = 0 : i64, scratch_operands = 0 : i64, tpu.core_type = #tpu.core_type<tc>, window_params = [{transform_indices = @transform_0, window_bounds = array<i64: 8, 32>}, {pipeline_mode = #tpu.pipeline_mode<synchronous>, transform_indices = @transform_1, window_bounds = array<i64: 32, 64>}, {pipeline_mode = #tpu.pipeline_mode<synchronous>, transform_indices = @transform_2, window_bounds = array<i64: 1, 64>}, {pipeline_mode = #tpu.pipeline_mode<synchronous>, transform_indices = @transform_3, window_bounds = array<i64: 64, 64>}, {pipeline_mode = #tpu.pipeline_mode<synchronous>, transform_indices = @transform_4, window_bounds = array<i64: 1, 64>}, {pipeline_mode = #tpu.pipeline_mode<synchronous>, transform_indices = @transform_5, window_bounds = array<i64: 64, 16>}, {pipeline_mode = #tpu.pipeline_mode<synchronous>, transform_indices = @transform_6, window_bounds = array<i64: 1, 16>}, {transform_indices = @transform_7, window_bounds = array<i64: 8, 16>}]} {
    %c0 = arith.constant 0 : index
    %c0_0 = arith.constant 0 : index
    %0 = vector.load %arg1[%c0, %c0_0] : memref<8x32xf32, #tpu.memory_space<vmem>>, vector<8x32xf32>
    %1 = arith.truncf %0 : vector<8x32xf32> to vector<8x32xbf16>
    %c0_1 = arith.constant 0 : index
    %c0_2 = arith.constant 0 : index
    %2 = vector.load %arg2[%c0_1, %c0_2] : memref<32x64xbf16, #tpu.memory_space<vmem>>, vector<32x64xbf16>
    %cst = arith.constant dense<0.000000e+00> : vector<8x64xf32>
    %3 = tpu.matmul %1, %2, %cst {dimension_numbers = #tpu.dot_dimension_numbers<[1], [0], [0], [1], [0, 0, 1, 1], [], []>} : vector<8x32xbf16>, vector<32x64xbf16>, vector<8x64xf32> -> vector<8x64xf32>
    %c0_3 = arith.constant 0 : index
    %c0_4 = arith.constant 0 : index
    %4 = vector.load %arg3[%c0_3, %c0_4] : memref<1x64xf32, #tpu.memory_space<vmem>>, vector<1x64xf32>
    %5 = vector.broadcast %4 : vector<1x64xf32> to vector<8x64xf32>
    %6 = arith.addf %3, %5 : vector<8x64xf32>
    %cst_5 = arith.constant 0.000000e+00 : f32
    %7 = vector.broadcast %cst_5 : f32 to vector<8x64xf32>
    %8 = arith.maximumf %6, %7 : vector<8x64xf32>
    %9 = arith.truncf %8 : vector<8x64xf32> to vector<8x64xbf16>
    %c0_6 = arith.constant 0 : index
    %c0_7 = arith.constant 0 : index
    %10 = vector.load %arg4[%c0_6, %c0_7] : memref<64x64xbf16, #tpu.memory_space<vmem>>, vector<64x64xbf16>
    %cst_8 = arith.constant dense<0.000000e+00> : vector<8x64xf32>
    %11 = tpu.matmul %9, %10, %cst_8 {dimension_numbers = #tpu.dot_dimension_numbers<[1], [0], [0], [1], [0, 0, 1, 1], [], []>} : vector<8x64xbf16>, vector<64x64xbf16>, vector<8x64xf32> -> vector<8x64xf32>
    %c0_9 = arith.constant 0 : index
    %c0_10 = arith.constant 0 : index
    %12 = vector.load %arg5[%c0_9, %c0_10] : memref<1x64xf32, #tpu.memory_space<vmem>>, vector<1x64xf32>
    %13 = vector.broadcast %12 : vector<1x64xf32> to vector<8x64xf32>
    %14 = arith.addf %11, %13 : vector<8x64xf32>
    %cst_11 = arith.constant 0.000000e+00 : f32
    %15 = vector.broadcast %cst_11 : f32 to vector<8x64xf32>
    %16 = arith.maximumf %14, %15 : vector<8x64xf32>
    %17 = arith.truncf %16 : vector<8x64xf32> to vector<8x64xbf16>
    %c0_12 = arith.constant 0 : index
    %c0_13 = arith.constant 0 : index
    %18 = vector.load %arg6[%c0_12, %c0_13] : memref<64x16xbf16, #tpu.memory_space<vmem>>, vector<64x16xbf16>
    %cst_14 = arith.constant dense<0.000000e+00> : vector<8x16xf32>
    %19 = tpu.matmul %17, %18, %cst_14 {dimension_numbers = #tpu.dot_dimension_numbers<[1], [0], [0], [1], [0, 0, 1, 1], [], []>} : vector<8x64xbf16>, vector<64x16xbf16>, vector<8x16xf32> -> vector<8x16xf32>
    %c0_15 = arith.constant 0 : index
    %c0_16 = arith.constant 0 : index
    %20 = vector.load %arg7[%c0_15, %c0_16] : memref<1x16xf32, #tpu.memory_space<vmem>>, vector<1x16xf32>
    %21 = vector.broadcast %20 : vector<1x16xf32> to vector<8x16xf32>
    %22 = arith.addf %19, %21 : vector<8x16xf32>
    %c0_17 = arith.constant 0 : index
    %c0_18 = arith.constant 0 : index
    %23 = vector.load %arg8[%c0_17, %c0_18] : memref<8x16xf32, #tpu.memory_space<vmem>>, vector<8x16xf32>
    tpu.vector_store %arg8[%c0_17, %c0_18], %22 {strides = array<i32>} : memref<8x16xf32, #tpu.memory_space<vmem>>, vector<8x16xf32>,
    return
  }
  func.func @transform_0(%arg0: i32) -> (i32, i32) {
    %c0_i32 = arith.constant 0 : i32
    %c0_i32_0 = arith.constant 0 : i32
    return %arg0, %c0_i32 : i32, i32
  }
  func.func @transform_1(%arg0: i32) -> (i32, i32) {
    %c0_i32 = arith.constant 0 : i32
    %c0_i32_0 = arith.constant 0 : i32
    %c0_i32_1 = arith.constant 0 : i32
    return %c0_i32, %c0_i32_0 : i32, i32
  }
  func.func @transform_2(%arg0: i32) -> (i32, i32) {
    %c0_i32 = arith.constant 0 : i32
    %c0_i32_0 = arith.constant 0 : i32
    %c0_i32_1 = arith.constant 0 : i32
    return %c0_i32, %c0_i32_0 : i32, i32
  }
  func.func @transform_3(%arg0: i32) -> (i32, i32) {
    %c0_i32 = arith.constant 0 : i32
    %c0_i32_0 = arith.constant 0 : i32
    %c0_i32_1 = arith.constant 0 : i32
    return %c0_i32, %c0_i32_0 : i32, i32
  }
  func.func @transform_4(%arg0: i32) -> (i32, i32) {
    %c0_i32 = arith.constant 0 : i32
    %c0_i32_0 = arith.constant 0 : i32
    %c0_i32_1 = arith.constant 0 : i32
    return %c0_i32, %c0_i32_0 : i32, i32
  }
  func.func @transform_5(%arg0: i32) -> (i32, i32) {
    %c0_i32 = arith.constant 0 : i32
    %c0_i32_0 = arith.constant 0 : i32
    %c0_i32_1 = arith.constant 0 : i32
    return %c0_i32, %c0_i32_0 : i32, i32
  }
  func.func @transform_6(%arg0: i32) -> (i32, i32) {
    %c0_i32 = arith.constant 0 : i32
    %c0_i32_0 = arith.constant 0 : i32
    %c0_i32_1 = arith.constant 0 : i32
    return %c0_i32, %c0_i32_0 : i32, i32
  }
  func.func @transform_7(%arg0: i32) -> (i32, i32) {
    %c0_i32 = arith.constant 0 : i32
    %c0_i32_0 = arith.constant 0 : i32
    return %arg0, %c0_i32 : i32, i32
  }
}

</mosaic_0001>

<llo_original>
// kernel: tpu_custom_call.1
$region0: #{tpu_custom_call.1}
  #allocation0 [shape = 'u32[]', space=smem, size = 0x4, offset = 0x4, fixed_abs, tag = 'smem constant byte address 0x4 - core index']
  #allocation1 [shape = 'u32[72,128]{1,0:T(1,128)}', space=vmem, size = 0x9000, scoped, tag = 'internal scratch']
  %s0 = inlined_call_operand.vmem [shape: f32[8,32], index: 0, kind: input, shape index: {}]
  %s1 = inlined_call_operand.hbm [shape: bf16[32,64], index: 1, kind: input, shape index: {}]
  %s2 = inlined_call_operand.vmem [shape: f32[1,64], index: 2, kind: input, shape index: {}]
  %s3 = inlined_call_operand.vmem [shape: bf16[64,64], index: 3, kind: input, shape index: {}]
  %s4 = inlined_call_operand.vmem [shape: f32[1,64], index: 4, kind: input, shape index: {}]
  %s5 = inlined_call_operand.vmem [shape: bf16[64,16], index: 5, kind: input, shape index: {}]
  %s6 = inlined_call_operand.vmem [shape: f32[1,16], index: 6, kind: input, shape index: {}]
  %s7 = inlined_call_operand.hbm [shape: f32[8,16], index: 7, kind: output, shape index: {}]
  %s8 = sld [smem:[#allocation0]]
  $region42: #{tpu_custom_call.1} parent=0
    _
  %s10 = ssub.s32 1, %s8
  %s11 = scalar_select 0, %s10, %s8
  $region1: #{tpu_custom_call.1} parent=0
    #allocation2 [shape = 'u8[8192]{0}', space=vmem, size = 0x2000, scoped, tag = 'input window, operand 1, single buffered']
    #allocation3 [shape = 's32[1]{0}', space=sflag, size = 0x4, scoped, tag = 'scoped memory for tpu_custom_call.1']
    #allocation4 [shape = 's32[1]{0}', space=sflag, size = 0x4, scoped, tag = 'scoped memory for tpu_custom_call.1']
    #allocation5 [shape = 'u8[4096]{0}', space=vmem, size = 0x1000, scoped, tag = 'output window, operand 0, single buffered']
    %12 = vsyncpa [#allocation3], 0
    %13 = vsyncpa [#allocation4], 0
    // Predicated region
    $region2: #{tpu_custom_call.1} parent=1 // pred_check
      _
    $region3: #{tpu_custom_call.1} parent=1 // pred_check_branch
      %15 = sbr.rel (0) target = $region5
    $region4: #{tpu_custom_call.1} parent=1 // pred_region
      _
    $region5: #{tpu_custom_call.1} parent=1 // pred_fallthru
      _
    // Predicated region
    $region6: #{tpu_custom_call.1} parent=1 // pred_check
      _
    $region7: #{tpu_custom_call.1} parent=1 // pred_check_branch
      %17 = sbr.rel (0) target = $region9
    $region8: #{tpu_custom_call.1} parent=1 // pred_region
      %19 = vsyncadd [#allocation3], 0
      %s20 = sshll.u32 %s1, 4
      %s21 = int_to_ptr.hbm [resolvable:$true] %s20
      %s22 = sshll.u32 [#allocation2], 4
      %s23 = int_to_ptr.vmem [resolvable:$true] %s22
      %28 = dma.hbm_to_vmem [thread:$0]  %s21, 256, %s23, [#allocation3], 64, 64, 4
    $region9: #{tpu_custom_call.1} parent=1 // pred_fallthru
      _
    // Predicated region
    $region10: #{tpu_custom_call.1} parent=1 // pred_check
      _
    $region11: #{tpu_custom_call.1} parent=1 // pred_check_branch
      %30 = sbr.rel (0) target = $region13
    $region12: #{tpu_custom_call.1} parent=1 // pred_region
      _
    $region13: #{tpu_custom_call.1} parent=1 // pred_fallthru
      _
    // Predicated region
    $region14: #{tpu_custom_call.1} parent=1 // pred_check
      _
    $region15: #{tpu_custom_call.1} parent=1 // pred_check_branch
      %32 = sbr.rel (0) target = $region17
    $region16: #{tpu_custom_call.1} parent=1 // pred_region
      _
    $region17: #{tpu_custom_call.1} parent=1 // pred_fallthru
      _
    // Predicated region
    $region18: #{tpu_custom_call.1} parent=1 // pred_check
      _
    $region19: #{tpu_custom_call.1} parent=1 // pred_check_branch
      %34 = sbr.rel (0) target = $region21
    $region20: #{tpu_custom_call.1} parent=1 // pred_region
      _
    $region21: #{tpu_custom_call.1} parent=1 // pred_fallthru
      _
    // Predicated region
    $region22: #{tpu_custom_call.1} parent=1 // pred_check
      _
    $region23: #{tpu_custom_call.1} parent=1 // pred_check_branch
      %36 = sbr.rel (0) target = $region25
    $region24: #{tpu_custom_call.1} parent=1 // pred_region
      _
    $region25: #{tpu_custom_call.1} parent=1 // pred_fallthru
      _
    // Predicated region
    $region26: #{tpu_custom_call.1} parent=1 // pred_check
      _
    $region27: #{tpu_custom_call.1} parent=1 // pred_check_branch
      %38 = sbr.rel (0) target = $region29
    $region28: #{tpu_custom_call.1} parent=1 // pred_region
      _
    $region29: #{tpu_custom_call.1} parent=1 // pred_fallthru
      _
    // Predicated region
    $region30: #{tpu_custom_call.1} parent=1 // pred_check
      _
    $region31: #{tpu_custom_call.1} parent=1 // pred_check_branch
      %40 = sbr.rel (0) target = $region33
    $region32: #{tpu_custom_call.1} parent=1 // pred_region
      %42 = dma.done [#allocation3], 256
    $region33: #{tpu_custom_call.1} parent=1 // pred_fallthru
      _
    %v44 = vld [vmem:[%s0] sm:$0xff]
    %v45 = vpack.c.bf16 %v44, %v44
    %v46 = vld [vmem:[#allocation2] sm:$0xf]
    %v47 = vld [vmem:[#allocation2 + $0x4] sm:$0xf]
    %v48 = vld [vmem:[#allocation2 + $0x8] sm:$0xf]
    %v49 = vld [vmem:[#allocation2 + $0xc] sm:$0xf]
    %v50 = vld [vmem:[%s2] sm:$0x1]
    %v52 = vperm.slane %v50, 0
    %v58 = vunpack.c.l.b16 %v46
    %v59 = vunpack.c.l.b16 %v47
    %v60 = vunpack.c.l.b16 %v48
    %v61 = vunpack.c.l.b16 %v49
    %v62 = vpack.c.b16 %v59, %v58
    %v63 = vpack.c.b16 %v61, %v60
    %vm66 = vcmask 261120
    %v68 = vsel %vm66, %v45, 0
    %70 = vmatpush.bf16.msra.mxu0 0
    %71 = vmatpush.bf16.msra.mxu0 0
    %72 = vmatpush.bf16.msra.mxu0 0
    %73 = vmatpush.bf16.msra.mxu0 0
    %74 = vmatpush.bf16.msra.mxu0 0
    %75 = vmatpush.bf16.msra.mxu0 0
    %76 = vmatpush.bf16.msra.mxu0 %v63
    %77 = vmatpush.bf16.msra.mxu0 %v62
    %78 = vmatmul.bf16.gmra.mxu0 %v68
    %v79 = vpop.f32.mrf.mxu0
    %v80 = vadd.f32 %v52, %v79
    %v81 = vpop.f32.mrf.mxu0
    %82 = vdwg.mxu0
    %v83 = vmax.f32 %v80, 0.0
    %v84 = vpack.c.bf16 %v83, %v83
    %v85 = vld [vmem:[%s3] sm:$0xf]
    %v86 = vld [vmem:[%s3 + $0x4] sm:$0xf]
    %v87 = vld [vmem:[%s3 + $0x8] sm:$0xf]
    %v88 = vld [vmem:[%s3 + $0xc] sm:$0xf]
    %v89 = vld [vmem:[%s3 + $0x10] sm:$0xf]
    %v90 = vld [vmem:[%s3 + $0x14] sm:$0xf]
    %v91 = vld [vmem:[%s3 + $0x18] sm:$0xf]
    %v92 = vld [vmem:[%s3 + $0x1c] sm:$0xf]
    %v93 = vld [vmem:[%s4] sm:$0x1]
    %v95 = vperm.slane %v93, 0
    %v105 = vunpack.c.l.b16 %v85
    %v106 = vunpack.c.l.b16 %v86
    %v107 = vunpack.c.l.b16 %v87
    %v108 = vunpack.c.l.b16 %v88
    %v109 = vunpack.c.l.b16 %v89
    %v110 = vunpack.c.l.b16 %v90
    %v111 = vunpack.c.l.b16 %v91
    %v112 = vunpack.c.l.b16 %v92
    %v113 = vpack.c.b16 %v106, %v105
    %v114 = vpack.c.b16 %v108, %v107
    %v115 = vpack.c.b16 %v110, %v109
    %v116 = vpack.c.b16 %v112, %v111
    %vm121 = vcmask 523264
    %v123 = vsel %vm121, %v84, 0
    %125 = vmatpush.bf16.msra.mxu0 0
    %126 = vmatpush.bf16.msra.mxu0 0
    %127 = vmatpush.bf16.msra.mxu0 0
    %128 = vmatpush.bf16.msra.mxu0 0
    %129 = vmatpush.bf16.msra.mxu0 %v116
    %130 = vmatpush.bf16.msra.mxu0 %v115
    %131 = vmatpush.bf16.msra.mxu0 %v114
    %132 = vmatpush.bf16.msra.mxu0 %v113
    %133 = vmatmul.bf16.gmra.mxu0 %v123
    %v134 = vpop.f32.mrf.mxu0
    %v135 = vadd.f32 %v95, %v134
    %v136 = vpop.f32.mrf.mxu0
    %137 = vdwg.mxu0
    %v138 = vmax.f32 %v135, 0.0
    %v139 = vpack.c.bf16 %v138, %v138
    %v140 = vld [vmem:[%s5] sm:$0xf]
    %v141 = vld [vmem:[%s5 + $0x4] sm:$0xf]
    %v142 = vld [vmem:[%s5 + $0x8] sm:$0xf]
    %v143 = vld [vmem:[%s5 + $0xc] sm:$0xf]
    %v144 = vld [vmem:[%s5 + $0x10] sm:$0xf]
    %v145 = vld [vmem:[%s5 + $0x14] sm:$0xf]
    %v146 = vld [vmem:[%s5 + $0x18] sm:$0xf]
    %v147 = vld [vmem:[%s5 + $0x1c] sm:$0xf]
    %v148 = vld [vmem:[%s6] sm:$0x1]
    %v150 = vperm.slane %v148, 0
    %v160 = vunpack.c.l.b16 %v140
    %v161 = vunpack.c.l.b16 %v141
    %v162 = vunpack.c.l.b16 %v142
    %v163 = vunpack.c.l.b16 %v143
    %v164 = vunpack.c.l.b16 %v144
    %v165 = vunpack.c.l.b16 %v145
    %v166 = vunpack.c.l.b16 %v146
    %v167 = vunpack.c.l.b16 %v147
    %v168 = vpack.c.b16 %v161, %v160
    %v169 = vpack.c.b16 %v163, %v162
    %v170 = vpack.c.b16 %v165, %v164
    %v171 = vpack.c.b16 %v167, %v166
    %v177 = vsel %vm121, %v139, 0
    %179 = vmatpush.bf16.msra.mxu0 0
    %180 = vmatpush.bf16.msra.mxu0 0
    %181 = vmatpush.bf16.msra.mxu0 0
    %182 = vmatpush.bf16.msra.mxu0 0
    %183 = vmatpush.bf16.msra.mxu0 %v171
    %184 = vmatpush.bf16.msra.mxu0 %v170
    %185 = vmatpush.bf16.msra.mxu0 %v169
    %186 = vmatpush.bf16.msra.mxu0 %v168
    %187 = vmatmul.bf16.gmra.mxu0 %v177
    %v188 = vpop.f32.mrf.mxu0
    %v189 = vadd.f32 %v150, %v188
    %v190 = vpop.f32.mrf.mxu0
    %191 = vdwg.mxu0
    %vm192 = vcmask 130048
    %193 = vst.msk [vmem:[#allocation5] sm:$0xff] %vm192, %v189
    // Predicated region
    $region34: #{tpu_custom_call.1} parent=1 // pred_check
      _
    $region35: #{tpu_custom_call.1} parent=1 // pred_check_branch
      %195 = sbr.rel (0) target = $region37
    $region36: #{tpu_custom_call.1} parent=1 // pred_region
      %197 = vsyncadd [#allocation4], 0
      %s199 = sshll.u32 [#allocation5], 4
      %s200 = int_to_ptr.vmem [resolvable:$true] %s199
      %s201 = sshll.u32 %s7, 4
      %s202 = int_to_ptr.hbm [resolvable:$true] %s201
      %204 = dma.vmem_to_hbm [thread:$0]  %s200, 128, %s202, [#allocation4]
    $region37: #{tpu_custom_call.1} parent=1 // pred_fallthru
      _
    // Predicated region
    $region38: #{tpu_custom_call.1} parent=1 // pred_check
      _
    $region39: #{tpu_custom_call.1} parent=1 // pred_check_branch
      %206 = sbr.rel (0) target = $region41
    $region40: #{tpu_custom_call.1} parent=1 // pred_region
      %208 = dma.done [#allocation4], 128
    $region41: #{tpu_custom_call.1} parent=1 // pred_fallthru
      _
    %209 = vsyncpa [#allocation3], 1
    %210 = vsyncpa [#allocation4], 1

</llo_original>
